<compile_context>
chip_gen: v7x
topology: tpu7x:2x2x1
jax: 0.10.0
libtpu: 0.0.40
codegen_flags: <defaults>
</compile_context>

<pallas_src>
from typing import NamedTuple

import jax
import jax.numpy as jnp
from jax.experimental import pallas as pl
from jax.experimental.pallas import tpu as pltpu


def _round_up(x: int, m: int) -> int:
    return ((x + m - 1) // m) * m


def _cdiv(a: int, b: int) -> int:
    return (a + b - 1) // b


class DecoderParams(NamedTuple):
    w1: jax.Array          # (K_pad, H_pad) compute dtype
    b1: jax.Array          # (1, H_pad)     f32
    w2: jax.Array          # (H_pad, C_pad) compute dtype
    b2: jax.Array          # (1, C_pad)     f32
    z_dim: int
    hidden: int
    num_channels: int


def prepare_decoder_params(w1, b1, w2, b2, compute_dtype=jnp.bfloat16):
    """One-time parameter prep (hoisted out of the forward pass).

    Pads hidden/output dims to full 128-lane width, pads the z contraction dim
    only to the sublane packing multiple, and casts the matmul operands to the
    MXU compute dtype.  Zero padding keeps the math exact (ReLU(0)=0, padded
    W2 rows are 0, padded output columns are sliced off).
    """
    z_dim, hidden = w1.shape
    num_channels = w2.shape[1]
    itemsize = jnp.dtype(compute_dtype).itemsize
    k_mult = 8 * (4 // itemsize)            # 8 for f32, 16 for bf16 (sublane packing)
    K_pad = _round_up(z_dim, k_mult)        # contraction: sublane-aligned only
    H_pad = _round_up(hidden, 128)
    C_pad = _round_up(num_channels, 128)

    w1_p = jnp.pad(w1, ((0, K_pad - z_dim), (0, H_pad - hidden))).astype(compute_dtype)
    w2_p = jnp.pad(w2, ((0, H_pad - hidden), (0, C_pad - num_channels))).astype(compute_dtype)
    # Biases stay f32: the bias/ReLU/sigmoid epilogue runs in f32 on all chips
    # (v5e's VPU/EUP have no bf16).
    b1_p = jnp.pad(b1, (0, H_pad - hidden)).reshape(1, H_pad).astype(jnp.float32)
    b2_p = jnp.pad(b2, (0, C_pad - num_channels)).reshape(1, C_pad).astype(jnp.float32)
    return DecoderParams(w1_p, b1_p, w2_p, b2_p, z_dim, hidden, num_channels)


def decoder_kernel(x_ref, w1_ref, b1_ref, w2_ref, b2_ref, o_ref, h_ref):
    # Grid = (batch tiles, output-column tiles).  Layer 1 runs once per batch
    # tile (j == 0); its ReLU output is kept in VMEM scratch (compute dtype)
    # and reused for every output-column tile of layer 2.
    @pl.when(pl.program_id(1) == 0)
    def _():
        h = jnp.dot(x_ref[...], w1_ref[...], preferred_element_type=jnp.float32)
        h = jnp.maximum(h + b1_ref[...], 0.0)          # bias + ReLU in f32
        h_ref[...] = h.astype(h_ref.dtype)             # downcast once for 2nd MXU pass

    y = jnp.dot(h_ref[...], w2_ref[...], preferred_element_type=jnp.float32)
    y = y + b2_ref[...]
    # sigmoid(y) == 0.5 * tanh(0.5 * y) + 0.5 : one EUP push per vreg.
    o_ref[...] = (0.5 * jnp.tanh(0.5 * y) + 0.5).astype(o_ref.dtype)


def decoder_forward(x, params: DecoderParams, *, max_rows_per_tile=512,
                    max_cols_per_tile=1024, out_dtype=None, keep_padded=False):
    """x: (B, z_dim) -> (B, num_channels)."""
    B, z_dim = x.shape
    assert z_dim == params.z_dim, "z_dim mismatch with prepared params"
    K_pad, H_pad = params.w1.shape
    C_pad = params.w2.shape[1]
    C = params.num_channels
    compute_dtype = params.w1.dtype
    out_dtype = out_dtype or x.dtype

    # --- Batch tiling: balanced tiles (pad waste < one sublane group) and at
    # least two tiles when B >= 16 so both v7x TensorCores get work.
    num_btiles = max(1, _cdiv(B, max_rows_per_tile))
    if num_btiles == 1 and B >= 16:
        num_btiles = 2
    tm = max(8, _round_up(_cdiv(B, num_btiles), 8))
    B_pad = num_btiles * tm

    # --- Output-column tiling (only kicks in for wide decoders): bounds the
    # per-step W2/out VMEM footprint and restores W2 DMA pipelining on v7x.
    num_ctiles = 1
    if C_pad > max_cols_per_tile:
        num_ctiles = max(1, C_pad // max_cols_per_tile)
        while C_pad % num_ctiles or (C_pad // num_ctiles) % 128:
            num_ctiles -= 1
    tn = C_pad // num_ctiles

    # x: minimal padding (rows to B_pad, z only to the sublane multiple), then
    # cast to the MXU compute dtype.  No 128-lane padding of the K dim in HBM.
    x_p = x
    if B_pad != B or K_pad != z_dim:
        x_p = jnp.pad(x, ((0, B_pad - B), (0, K_pad - z_dim)))
    x_p = x_p.astype(compute_dtype)

    cdt = jnp.dtype(compute_dtype).itemsize
    odt = jnp.dtype(out_dtype).itemsize

    # Explicit VMEM budget: double-buffered x/out tiles, single-buffered
    # constant weights, layer-1 scratch, f32 epilogue temporaries, + headroom.
    w2_bufs = 1 if num_ctiles == 1 else 2
    working = (2 * tm * K_pad * cdt
               + K_pad * H_pad * cdt + H_pad * 4
               + w2_bufs * (H_pad * tn * cdt + tn * 4)
               + 2 * tm * tn * odt
               + tm * H_pad * cdt
               + tm * max(H_pad, tn) * 4)
    vmem_limit = max(16 << 20, min(int(1.5 * working) + (4 << 20), 96 << 20))

    cost = pl.CostEstimate(
        flops=2 * B_pad * H_pad * (K_pad + C_pad),
        transcendentals=B_pad * C_pad,
        bytes_accessed=int(B_pad * K_pad * cdt
                           + K_pad * H_pad * cdt
                           + num_btiles * H_pad * C_pad * cdt
                           + (H_pad + C_pad) * 4
                           + B_pad * C_pad * odt),
    )

    def _run(use_resident_hint: bool):
        def spec(block_shape, index_map, constant):
            if use_resident_hint and constant:
                # Constant index_map -> never re-fetched; one VMEM buffer is enough.
                return pl.BlockSpec(block_shape, index_map,
                                    pipeline_mode=pl.Buffered(1))
            return pl.BlockSpec(block_shape, index_map)

        in_specs = [
            pl.BlockSpec((tm, K_pad), lambda i, j: (i, 0)),               # x tile
            spec((K_pad, H_pad), lambda i, j: (0, 0), True),              # W1 resident
            spec((1, H_pad), lambda i, j: (0, 0), True),                  # b1 resident
            spec((H_pad, tn), lambda i, j: (0, j), num_ctiles == 1),      # W2
            spec((1, tn), lambda i, j: (0, j), num_ctiles == 1),          # b2
        ]
        return pl.pallas_call(
            decoder_kernel,
            out_shape=jax.ShapeDtypeStruct((B_pad, C_pad), out_dtype),
            grid=(num_btiles, num_ctiles),
            in_specs=in_specs,
            out_specs=pl.BlockSpec((tm, tn), lambda i, j: (i, j)),
            scratch_shapes=[pltpu.VMEM((tm, H_pad), compute_dtype)],
            compiler_params=pltpu.CompilerParams(
                # Batch axis megacore-parallel; column axis carries the layer-1 scratch.
                dimension_semantics=("parallel", "arbitrary"),
                vmem_limit_bytes=vmem_limit,
            ),
            cost_estimate=cost,
        )(x_p, params.w1, params.b1, params.w2, params.b2)

    try:
        out_padded = _run(True)
    except Exception:
        # jax versions without BlockSpec pipeline_mode / Buffered(1): identical
        # kernel with default double-buffered weight blocks.
        out_padded = _run(False)

    # Skip the extra HBM pass when nothing was padded (or caller accepts padding).
    if keep_padded or (B_pad == B and C_pad == C):
        return out_padded
    return out_padded[:B, :C]


def init_linear(key, in_features, out_features, dtype=jnp.float32):
    """Mimic torch.nn.Linear default init: U(-1/sqrt(fan_in), 1/sqrt(fan_in))."""
    kw, kb = jax.random.split(key)
    bound = 1.0 / jnp.sqrt(jnp.asarray(in_features, dtype))
    # torch weight is (out, in); we store transposed (in, out) for the kernel.
    w = jax.random.uniform(kw, (in_features, out_features), dtype, -bound, bound)
    b = jax.random.uniform(kb, (out_features,), dtype, -bound, bound)
    return w, b


if __name__ == "__main__":
    # Small, deterministic example shapes.
    batch, z_dim, hidden_size, num_channels = 8, 16, 32, 8

    key = jax.random.PRNGKey(0)
    kx, k1, k2 = jax.random.split(key, 3)

    x = jax.random.normal(kx, (batch, z_dim), dtype=jnp.float32)
    w1, b1 = init_linear(k1, z_dim, hidden_size)
    w2, b2 = init_linear(k2, hidden_size, num_channels)

    # Reference in plain JAX (same math as the PyTorch module).
    ref = jax.nn.sigmoid(jnp.maximum(x @ w1 + b1, 0.0) @ w2 + b2)

    # Default: bf16 MXU operands, f32 accumulation + epilogue.
    params = prepare_decoder_params(w1, b1, w2, b2)             # one-time prep
    out = jax.block_until_ready(decoder_forward(x, params))
    assert out.shape == (batch, num_channels)
    assert out.dtype == x.dtype
    assert jnp.allclose(out, ref, atol=2e-2, rtol=2e-2), "bf16 path mismatch vs reference"

    # Full-f32 compute mode for a tight numerical check of the padding/fusion math.
    params_f32 = prepare_decoder_params(w1, b1, w2, b2, compute_dtype=jnp.float32)
    out_f32 = jax.block_until_ready(decoder_forward(x, params_f32))
    assert jnp.allclose(out_f32, ref, atol=1e-4, rtol=1e-4), "f32 path mismatch vs reference"

    print("KERNEL_OK")
</pallas_src>

<mosaic_0001>
module attributes {stable_mosaic.version = 11 : i64} {
  func.func @decoder_kernel(%arg0: i32, %arg1: i32, %arg2: memref<8x16xbf16, #tpu.memory_space<vmem>>, %arg3: memref<16x128xbf16, #tpu.memory_space<vmem>>, %arg4: memref<1x128xf32, #tpu.memory_space<vmem>>, %arg5: memref<128x128xbf16, #tpu.memory_space<vmem>>, %arg6: memref<1x128xf32, #tpu.memory_space<vmem>>, %arg7: memref<8x128xf32, #tpu.memory_space<vmem>>, %arg8: memref<8x128xbf16, #tpu.memory_space<vmem>>) attributes {dimension_semantics = [#tpu.dimension_semantics<parallel>, #tpu.dimension_semantics<arbitrary>], iteration_bounds = array<i64: 1, 1>, scalar_prefetch = 0 : i64, scratch_operands = 1 : i64, tpu.core_type = #tpu.core_type<tc>, window_params = [{transform_indices = @transform_0, window_bounds = array<i64: 8, 16>}, {pipeline_mode = #tpu.pipeline_mode<synchronous>, transform_indices = @transform_1, window_bounds = array<i64: 16, 128>}, {pipeline_mode = #tpu.pipeline_mode<synchronous>, transform_indices = @transform_2, window_bounds = array<i64: 1, 128>}, {pipeline_mode = #tpu.pipeline_mode<synchronous>, transform_indices = @transform_3, window_bounds = array<i64: 128, 128>}, {pipeline_mode = #tpu.pipeline_mode<synchronous>, transform_indices = @transform_4, window_bounds = array<i64: 1, 128>}, {transform_indices = @transform_5, window_bounds = array<i64: 8, 128>}]} {
    %c0_i32 = arith.constant 0 : i32
    %0 = arith.cmpi eq, %arg1, %c0_i32 : i32
    %1 = arith.extui %0 : i1 to i32
    %c0_i32_0 = arith.constant 0 : i32
    %2 = arith.cmpi ne, %1, %c0_i32_0 : i32
    scf.if %2 {
      %c0_11 = arith.constant 0 : index
      %c0_12 = arith.constant 0 : index
      %17 = vector.load %arg2[%c0_11, %c0_12] : memref<8x16xbf16, #tpu.memory_space<vmem>>, vector<8x16xbf16>
      %c0_13 = arith.constant 0 : index
      %c0_14 = arith.constant 0 : index
      %18 = vector.load %arg3[%c0_13, %c0_14] : memref<16x128xbf16, #tpu.memory_space<vmem>>, vector<16x128xbf16>
      %cst_15 = arith.constant dense<0.000000e+00> : vector<8x128xf32>
      %19 = tpu.matmul %17, %18, %cst_15 {dimension_numbers = #tpu.dot_dimension_numbers<[1], [0], [0], [1], [0, 0, 1, 1], [], []>} : vector<8x16xbf16>, vector<16x128xbf16>, vector<8x128xf32> -> vector<8x128xf32>
      %c0_16 = arith.constant 0 : index
      %c0_17 = arith.constant 0 : index
      %20 = vector.load %arg4[%c0_16, %c0_17] : memref<1x128xf32, #tpu.memory_space<vmem>>, vector<1x128xf32>
      %21 = vector.broadcast %20 : vector<1x128xf32> to vector<8x128xf32>
      %22 = arith.addf %19, %21 : vector<8x128xf32>
      %cst_18 = arith.constant 0.000000e+00 : f32
      %23 = vector.broadcast %cst_18 : f32 to vector<8x128xf32>
      %24 = arith.maximumf %22, %23 : vector<8x128xf32>
      %25 = arith.truncf %24 : vector<8x128xf32> to vector<8x128xbf16>
      %c0_19 = arith.constant 0 : index
      %c0_20 = arith.constant 0 : index
      %26 = vector.load %arg8[%c0_19, %c0_20] : memref<8x128xbf16, #tpu.memory_space<vmem>>, vector<8x128xbf16>
      tpu.vector_store %arg8[%c0_19, %c0_20], %25 {strides = array<i32>} : memref<8x128xbf16, #tpu.memory_space<vmem>>, vector<8x128xbf16>,
    } else {
    }
    %c0 = arith.constant 0 : index
    %c0_1 = arith.constant 0 : index
    %3 = vector.load %arg8[%c0, %c0_1] : memref<8x128xbf16, #tpu.memory_space<vmem>>, vector<8x128xbf16>
    %c0_2 = arith.constant 0 : index
    %c0_3 = arith.constant 0 : index
    %4 = vector.load %arg5[%c0_2, %c0_3] : memref<128x128xbf16, #tpu.memory_space<vmem>>, vector<128x128xbf16>
    %cst = arith.constant dense<0.000000e+00> : vector<8x128xf32>
    %5 = tpu.matmul %3, %4, %cst {dimension_numbers = #tpu.dot_dimension_numbers<[1], [0], [0], [1], [0, 0, 1, 1], [], []>} : vector<8x128xbf16>, vector<128x128xbf16>, vector<8x128xf32> -> vector<8x128xf32>
    %c0_4 = arith.constant 0 : index
    %c0_5 = arith.constant 0 : index
    %6 = vector.load %arg6[%c0_4, %c0_5] : memref<1x128xf32, #tpu.memory_space<vmem>>, vector<1x128xf32>
    %7 = vector.broadcast %6 : vector<1x128xf32> to vector<8x128xf32>
    %8 = arith.addf %5, %7 : vector<8x128xf32>
    %cst_6 = arith.constant 5.000000e-01 : f32
    %9 = vector.broadcast %cst_6 : f32 to vector<8x128xf32>
    %10 = arith.mulf %9, %8 : vector<8x128xf32>
    %11 = math.tanh %10 : vector<8x128xf32>
    %cst_7 = arith.constant 5.000000e-01 : f32
    %12 = vector.broadcast %cst_7 : f32 to vector<8x128xf32>
    %13 = arith.mulf %12, %11 : vector<8x128xf32>
    %cst_8 = arith.constant 5.000000e-01 : f32
    %14 = vector.broadcast %cst_8 : f32 to vector<8x128xf32>
    %15 = arith.addf %13, %14 : vector<8x128xf32>
    %c0_9 = arith.constant 0 : index
    %c0_10 = arith.constant 0 : index
    %16 = vector.load %arg7[%c0_9, %c0_10] : memref<8x128xf32, #tpu.memory_space<vmem>>, vector<8x128xf32>
    tpu.vector_store %arg7[%c0_9, %c0_10], %15 {strides = array<i32>} : memref<8x128xf32, #tpu.memory_space<vmem>>, vector<8x128xf32>,
    return
  }
  func.func @transform_0(%arg0: i32, %arg1: i32) -> (i32, i32) {
    %c0_i32 = arith.constant 0 : i32
    %c0_i32_0 = arith.constant 0 : i32
    return %arg0, %c0_i32 : i32, i32
  }
  func.func @transform_1(%arg0: i32, %arg1: i32) -> (i32, i32) {
    %c0_i32 = arith.constant 0 : i32
    %c0_i32_0 = arith.constant 0 : i32
    %c0_i32_1 = arith.constant 0 : i32
    return %c0_i32, %c0_i32_0 : i32, i32
  }
  func.func @transform_2(%arg0: i32, %arg1: i32) -> (i32, i32) {
    %c0_i32 = arith.constant 0 : i32
    %c0_i32_0 = arith.constant 0 : i32
    %c0_i32_1 = arith.constant 0 : i32
    return %c0_i32, %c0_i32_0 : i32, i32
  }
  func.func @transform_3(%arg0: i32, %arg1: i32) -> (i32, i32) {
    %c0_i32 = arith.constant 0 : i32
    %c0_i32_0 = arith.constant 0 : i32
    return %c0_i32, %arg1 : i32, i32
  }
  func.func @transform_4(%arg0: i32, %arg1: i32) -> (i32, i32) {
    %c0_i32 = arith.constant 0 : i32
    %c0_i32_0 = arith.constant 0 : i32
    return %c0_i32, %arg1 : i32, i32
  }
  func.func @transform_5(%arg0: i32, %arg1: i32) -> (i32, i32) {
    %c0_i32 = arith.constant 0 : i32
    return %arg0, %arg1 : i32, i32
  }
}

module attributes {stable_mosaic.version = 11 : i64} {
  func.func @decoder_kernel(%arg0: i32, %arg1: i32, %arg2: memref<8x16xbf16, #tpu.memory_space<vmem>>, %arg3: memref<16x128xbf16, #tpu.memory_space<vmem>>, %arg4: memref<1x128xf32, #tpu.memory_space<vmem>>, %arg5: memref<128x128xbf16, #tpu.memory_space<vmem>>, %arg6: memref<1x128xf32, #tpu.memory_space<vmem>>, %arg7: memref<8x128xf32, #tpu.memory_space<vmem>>, %arg8: memref<8x128xbf16, #tpu.memory_space<vmem>>) attributes {dimension_semantics = [#tpu.dimension_semantics<parallel>, #tpu.dimension_semantics<arbitrary>], iteration_bounds = array<i64: 1, 1>, scalar_prefetch = 0 : i64, scratch_operands = 1 : i64, tpu.core_type = #tpu.core_type<tc>, window_params = [{transform_indices = @transform_0, window_bounds = array<i64: 8, 16>}, {pipeline_mode = #tpu.pipeline_mode<synchronous>, transform_indices = @transform_1, window_bounds = array<i64: 16, 128>}, {pipeline_mode = #tpu.pipeline_mode<synchronous>, transform_indices = @transform_2, window_bounds = array<i64: 1, 128>}, {transform_indices = @transform_3, window_bounds = array<i64: 128, 128>}, {transform_indices = @transform_4, window_bounds = array<i64: 1, 128>}, {transform_indices = @transform_5, window_bounds = array<i64: 8, 128>}]} {
    %c0_i32 = arith.constant 0 : i32
    %0 = arith.cmpi eq, %arg1, %c0_i32 : i32
    %1 = arith.extui %0 : i1 to i32
    %c0_i32_0 = arith.constant 0 : i32
    %2 = arith.cmpi ne, %1, %c0_i32_0 : i32
    scf.if %2 {
      %c0_11 = arith.constant 0 : index
      %c0_12 = arith.constant 0 : index
      %17 = vector.load %arg2[%c0_11, %c0_12] : memref<8x16xbf16, #tpu.memory_space<vmem>>, vector<8x16xbf16>
      %c0_13 = arith.constant 0 : index
      %c0_14 = arith.constant 0 : index
      %18 = vector.load %arg3[%c0_13, %c0_14] : memref<16x128xbf16, #tpu.memory_space<vmem>>, vector<16x128xbf16>
      %cst_15 = arith.constant dense<0.000000e+00> : vector<8x128xf32>
      %19 = tpu.matmul %17, %18, %cst_15 {dimension_numbers = #tpu.dot_dimension_numbers<[1], [0], [0], [1], [0, 0, 1, 1], [], []>} : vector<8x16xbf16>, vector<16x128xbf16>, vector<8x128xf32> -> vector<8x128xf32>
      %c0_16 = arith.constant 0 : index
      %c0_17 = arith.constant 0 : index
      %20 = vector.load %arg4[%c0_16, %c0_17] : memref<1x128xf32, #tpu.memory_space<vmem>>, vector<1x128xf32>
      %21 = vector.broadcast %20 : vector<1x128xf32> to vector<8x128xf32>
      %22 = arith.addf %19, %21 : vector<8x128xf32>
      %cst_18 = arith.constant 0.000000e+00 : f32
      %23 = vector.broadcast %cst_18 : f32 to vector<8x128xf32>
      %24 = arith.maximumf %22, %23 : vector<8x128xf32>
      %25 = arith.truncf %24 : vector<8x128xf32> to vector<8x128xbf16>
      %c0_19 = arith.constant 0 : index
      %c0_20 = arith.constant 0 : index
      %26 = vector.load %arg8[%c0_19, %c0_20] : memref<8x128xbf16, #tpu.memory_space<vmem>>, vector<8x128xbf16>
      tpu.vector_store %arg8[%c0_19, %c0_20], %25 {strides = array<i32>} : memref<8x128xbf16, #tpu.memory_space<vmem>>, vector<8x128xbf16>,
    } else {
    }
    %c0 = arith.constant 0 : index
    %c0_1 = arith.constant 0 : index
    %3 = vector.load %arg8[%c0, %c0_1] : memref<8x128xbf16, #tpu.memory_space<vmem>>, vector<8x128xbf16>
    %c0_2 = arith.constant 0 : index
    %c0_3 = arith.constant 0 : index
    %4 = vector.load %arg5[%c0_2, %c0_3] : memref<128x128xbf16, #tpu.memory_space<vmem>>, vector<128x128xbf16>
    %cst = arith.constant dense<0.000000e+00> : vector<8x128xf32>
    %5 = tpu.matmul %3, %4, %cst {dimension_numbers = #tpu.dot_dimension_numbers<[1], [0], [0], [1], [0, 0, 1, 1], [], []>} : vector<8x128xbf16>, vector<128x128xbf16>, vector<8x128xf32> -> vector<8x128xf32>
    %c0_4 = arith.constant 0 : index
    %c0_5 = arith.constant 0 : index
    %6 = vector.load %arg6[%c0_4, %c0_5] : memref<1x128xf32, #tpu.memory_space<vmem>>, vector<1x128xf32>
    %7 = vector.broadcast %6 : vector<1x128xf32> to vector<8x128xf32>
    %8 = arith.addf %5, %7 : vector<8x128xf32>
    %cst_6 = arith.constant 5.000000e-01 : f32
    %9 = vector.broadcast %cst_6 : f32 to vector<8x128xf32>
    %10 = arith.mulf %9, %8 : vector<8x128xf32>
    %11 = math.tanh %10 : vector<8x128xf32>
    %cst_7 = arith.constant 5.000000e-01 : f32
    %12 = vector.broadcast %cst_7 : f32 to vector<8x128xf32>
    %13 = arith.mulf %12, %11 : vector<8x128xf32>
    %cst_8 = arith.constant 5.000000e-01 : f32
    %14 = vector.broadcast %cst_8 : f32 to vector<8x128xf32>
    %15 = arith.addf %13, %14 : vector<8x128xf32>
    %c0_9 = arith.constant 0 : index
    %c0_10 = arith.constant 0 : index
    %16 = vector.load %arg7[%c0_9, %c0_10] : memref<8x128xf32, #tpu.memory_space<vmem>>, vector<8x128xf32>
    tpu.vector_store %arg7[%c0_9, %c0_10], %15 {strides = array<i32>} : memref<8x128xf32, #tpu.memory_space<vmem>>, vector<8x128xf32>,
    return
  }
  func.func @transform_0(%arg0: i32, %arg1: i32) -> (i32, i32) {
    %c0_i32 = arith.constant 0 : i32
    %c0_i32_0 = arith.constant 0 : i32
    return %arg0, %c0_i32 : i32, i32
  }
  func.func @transform_1(%arg0: i32, %arg1: i32) -> (i32, i32) {
    %c0_i32 = arith.constant 0 : i32
    %c0_i32_0 = arith.constant 0 : i32
    %c0_i32_1 = arith.constant 0 : i32
    return %c0_i32, %c0_i32_0 : i32, i32
  }
  func.func @transform_2(%arg0: i32, %arg1: i32) -> (i32, i32) {
    %c0_i32 = arith.constant 0 : i32
    %c0_i32_0 = arith.constant 0 : i32
    %c0_i32_1 = arith.constant 0 : i32
    return %c0_i32, %c0_i32_0 : i32, i32
  }
  func.func @transform_3(%arg0: i32, %arg1: i32) -> (i32, i32) {
    %c0_i32 = arith.constant 0 : i32
    %c0_i32_0 = arith.constant 0 : i32
    return %c0_i32, %arg1 : i32, i32
  }
  func.func @transform_4(%arg0: i32, %arg1: i32) -> (i32, i32) {
    %c0_i32 = arith.constant 0 : i32
    %c0_i32_0 = arith.constant 0 : i32
    return %c0_i32, %arg1 : i32, i32
  }
  func.func @transform_5(%arg0: i32, %arg1: i32) -> (i32, i32) {
    %c0_i32 = arith.constant 0 : i32
    return %arg0, %arg1 : i32, i32
  }
}

</mosaic_0001>

<llo_original>
// kernel: tpu_custom_call.1
$region0: #{tpu_custom_call.1}
  #allocation0 [shape = 'u32[]', space=smem, size = 0x4, offset = 0x4, fixed_abs, tag = 'smem constant byte address 0x4 - core index']
  #allocation1 [shape = 'u32[144,128]{1,0:T(1,128)}', space=vmem, size = 0x12000, scoped, tag = 'internal scratch']
  #allocation2 [shape = 'bf16[8,128]{1,0:T(8,128)(2,1)}', space=vmem, size = 0x800, scoped, tag = 'scratch operand']
  %s0 = inlined_call_operand.hbm [shape: bf16[8,16], index: 0, kind: input, shape index: {}]
  %s1 = inlined_call_operand.hbm [shape: bf16[16,128], index: 1, kind: input, shape index: {}]
  %s2 = inlined_call_operand.vmem [shape: f32[1,128], index: 2, kind: input, shape index: {}]
  %s3 = inlined_call_operand.hbm [shape: bf16[128,128], index: 3, kind: input, shape index: {}]
  %s4 = inlined_call_operand.vmem [shape: f32[1,128], index: 4, kind: input, shape index: {}]
  %s5 = inlined_call_operand.hbm [shape: f32[8,128], index: 5, kind: output, shape index: {}]
  %s6 = sld [smem:[#allocation0]]
  $region46: #{tpu_custom_call.1} parent=0
    _
  %s8 = ssub.s32 1, %s6
  %s9 = scalar_select 0, %s8, %s6
  $region1: #{tpu_custom_call.1} parent=0
    #allocation3 [shape = 'u8[2048]{0}', space=vmem, size = 0x800, scoped, tag = 'input window, operand 0, single buffered']
    #allocation4 [shape = 's32[1]{0}', space=sflag, size = 0x4, scoped, tag = 'scoped memory for tpu_custom_call.1']
    #allocation5 [shape = 's32[1]{0}', space=sflag, size = 0x4, scoped, tag = 'scoped memory for tpu_custom_call.1']
    #allocation6 [shape = 'u8[4096]{0}', space=vmem, size = 0x1000, scoped, tag = 'input window, operand 1, single buffered']
    #allocation7 [shape = 's32[1]{0}', space=sflag, size = 0x4, scoped, tag = 'scoped memory for tpu_custom_call.1']
    #allocation8 [shape = 'u8[32768]{0}', space=vmem, size = 0x8000, scoped, tag = 'input window, operand 3, single buffered']
    #allocation9 [shape = 'u8[4096]{0}', space=vmem, size = 0x1000, scoped, tag = 'output window, operand 0, single buffered']
    %10 = vsyncpa [#allocation4], 0
    %11 = vsyncpa [#allocation7], 0
    %12 = vsyncpa [#allocation5], 0
    // Predicated region
    $region2: #{tpu_custom_call.1} parent=1 // pred_check
      _
    $region3: #{tpu_custom_call.1} parent=1 // pred_check_branch
      %14 = sbr.rel (0) target = $region5
    $region4: #{tpu_custom_call.1} parent=1 // pred_region
      %s16 = ssub.s32 64, 64
      %17 = vsyncadd [#allocation4], %s16
      %s19 = sshll.u32 [#allocation3], 4
      %s20 = int_to_ptr.vmem [resolvable:$true] %s19
      %22 = dma.hbm_to_vmem [thread:$0]  %s0, 64, %s20, [#allocation4]
    $region5: #{tpu_custom_call.1} parent=1 // pred_fallthru
      _
    // Predicated region
    $region6: #{tpu_custom_call.1} parent=1 // pred_check
      _
    $region7: #{tpu_custom_call.1} parent=1 // pred_check_branch
      %24 = sbr.rel (0) target = $region9
    $region8: #{tpu_custom_call.1} parent=1 // pred_region
      %s26 = ssub.s32 128, 128
      %27 = vsyncadd [#allocation7], %s26
      %s28 = sshll.u32 [#allocation6], 4
      %s29 = int_to_ptr.vmem [resolvable:$true] %s28
      %34 = dma.hbm_to_vmem [thread:$0]  %s1, 128, %s29, [#allocation7], 64, 64, 4
    $region9: #{tpu_custom_call.1} parent=1 // pred_fallthru
      _
    // Predicated region
    $region10: #{tpu_custom_call.1} parent=1 // pred_check
      _
    $region11: #{tpu_custom_call.1} parent=1 // pred_check_branch
      %36 = sbr.rel (0) target = $region13
    $region12: #{tpu_custom_call.1} parent=1 // pred_region
      _
    $region13: #{tpu_custom_call.1} parent=1 // pred_fallthru
      _
    // Predicated region
    $region14: #{tpu_custom_call.1} parent=1 // pred_check
      _
    $region15: #{tpu_custom_call.1} parent=1 // pred_check_branch
      %38 = sbr.rel (0) target = $region17
    $region16: #{tpu_custom_call.1} parent=1 // pred_region
      %s40 = ssub.s32 1024, 1024
      %41 = vsyncadd [#allocation7], %s40
      %s42 = sshll.u32 [#allocation8], 4
      %s43 = int_to_ptr.vmem [resolvable:$true] %s42
      %48 = dma.hbm_to_vmem [thread:$0]  %s3, 1024, %s43, [#allocation7], 64, 64, 4
    $region17: #{tpu_custom_call.1} parent=1 // pred_fallthru
      _
    // Predicated region
    $region18: #{tpu_custom_call.1} parent=1 // pred_check
      _
    $region19: #{tpu_custom_call.1} parent=1 // pred_check_branch
      %50 = sbr.rel (0) target = $region21
    $region20: #{tpu_custom_call.1} parent=1 // pred_region
      _
    $region21: #{tpu_custom_call.1} parent=1 // pred_fallthru
      _
    // Predicated region
    $region22: #{tpu_custom_call.1} parent=1 // pred_check
      _
    $region23: #{tpu_custom_call.1} parent=1 // pred_check_branch
      %52 = sbr.rel (0) target = $region25
    $region24: #{tpu_custom_call.1} parent=1 // pred_region
      %53 = dma.done [#allocation4], 64
    $region25: #{tpu_custom_call.1} parent=1 // pred_fallthru
      _
    // Predicated region
    $region26: #{tpu_custom_call.1} parent=1 // pred_check
      _
    $region27: #{tpu_custom_call.1} parent=1 // pred_check_branch
      %55 = sbr.rel (0) target = $region29
    $region28: #{tpu_custom_call.1} parent=1 // pred_region
      %56 = dma.done [#allocation7], 128
    $region29: #{tpu_custom_call.1} parent=1 // pred_fallthru
      _
    // Predicated region
    $region30: #{tpu_custom_call.1} parent=1 // pred_check
      _
    $region31: #{tpu_custom_call.1} parent=1 // pred_check_branch
      %58 = sbr.rel (0) target = $region33
    $region32: #{tpu_custom_call.1} parent=1 // pred_region
      %59 = dma.done [#allocation7], 1024
    $region33: #{tpu_custom_call.1} parent=1 // pred_fallthru
      _
    %p61 = scmp.eq.s32.totalorder 0, 0
    // Predicated region
    $region34: #{tpu_custom_call.1} parent=1 // pred_check
      %p62 = pneg %p61
    $region35: #{tpu_custom_call.1} parent=1 // pred_check_branch
      %64 = sbr.rel (%p62) target = $region37
    $region36: #{tpu_custom_call.1} parent=1 // pred_region
      %v65 = vld [vmem:[#allocation3] sm:$0xf]
      %v66 = vld [vmem:[#allocation6] sm:$0xf]
      %v67 = vld [vmem:[#allocation6 + $0x4] sm:$0xf]
      %v68 = vld [vmem:[%s2] sm:$0x1]
      %v70 = vlaneseq
      %v71 = vshrl.u32 %v70, 7
      %v72 = vsub.s32 0, %v71
      %v73 = vrot.slane %v68, %v72
      %v77 = vunpack.c.l.b16 %v66
      %v78 = vunpack.c.l.b16 %v67
      %v79 = vpack.c.b16 %v78, %v77
      %vm81 = vcmask 130048
      %v83 = vsel %vm81, %v65, 0
      %85 = vmatprep.subr.bf16.mxu0 0
      %86 = vmatpush1.bf16.msra.mxu0 %v79
      %87 = vmatprep.subr.bf16.mxu0 0
      %88 = vmatpush1.bf16.msra.mxu0 0
      %89 = vmatprep.subr.bf16.mxu0 0
      %90 = vmatpush1.bf16.msra.mxu0 0
      %91 = vmatprep.subr.bf16.mxu0 0
      %92 = vmatpush1.bf16.msra.mxu0 0
      %93 = vmatprep.subr.bf16.mxu0 0
      %94 = vmatpush1.bf16.msra.mxu0 0
      %95 = vmatprep.subr.bf16.mxu0 0
      %96 = vmatpush1.bf16.msra.mxu0 0
      %97 = vmatprep.subr.bf16.mxu0 0
      %98 = vmatpush1.bf16.msra.mxu0 0
      %99 = vmatprep.subr.bf16.mxu0 0
      %100 = vmatpush1.bf16.msra.mxu0 0
      %101 = vmatprep.subr.bf16.mxu0 0
      %102 = vmatpush1.bf16.msra.mxu0 0
      %103 = vmatprep.subr.bf16.mxu0 0
      %104 = vmatpush1.bf16.msra.mxu0 0
      %105 = vmatprep.subr.bf16.mxu0 0
      %106 = vmatpush1.bf16.msra.mxu0 0
      %107 = vmatprep.subr.bf16.mxu0 0
      %108 = vmatpush1.bf16.msra.mxu0 0
      %109 = vmatprep.subr.bf16.mxu0 0
      %110 = vmatpush1.bf16.msra.mxu0 0
      %111 = vmatprep.subr.bf16.mxu0 0
      %112 = vmatpush1.bf16.msra.mxu0 0
      %113 = vmatprep.subr.bf16.mxu0 0
      %114 = vmatpush1.bf16.msra.mxu0 0
      %115 = vmatprep.subr.bf16.mxu0 0
      %116 = vmatpush1.bf16.msra.mxu0 0
      %117 = vmatprep.mubr.bf16.mxu0 0
      %118 = vmatmul.mubr.bf16.gmra.mrb[0].mxu0 %v83
      %v119 = vpop.f32.mrb[0].mxu0
      %v120 = vadd.f32 %v73, %v119
      %v121 = vpop.f32.mrb[0].mxu0
      %v122 = vpop.f32.mrb[0].mxu0
      %v123 = vpop.f32.mrb[0].mxu0
      %124 = vdwg.mxu0
      %v125 = vmax.f32 %v120, 0.0
      %v126 = vpack.c.bf16 %v125, %v125
      %127 = vst [vmem:[#allocation2] sm:$0xf] %v126
    $region37: #{tpu_custom_call.1} parent=1 // pred_fallthru
      _
    %v128 = vld [vmem:[#allocation2] sm:$0xf]
    %v129 = vld [vmem:[#allocation8] sm:$0xf]
    %v130 = vld [vmem:[#allocation8 + $0x4] sm:$0xf]
    %v131 = vld [vmem:[#allocation8 + $0x8] sm:$0xf]
    %v132 = vld [vmem:[#allocation8 + $0xc] sm:$0xf]
    %v133 = vld [vmem:[#allocation8 + $0x10] sm:$0xf]
    %v134 = vld [vmem:[#allocation8 + $0x14] sm:$0xf]
    %v135 = vld [vmem:[#allocation8 + $0x18] sm:$0xf]
    %v136 = vld [vmem:[#allocation8 + $0x1c] sm:$0xf]
    %v137 = vld [vmem:[#allocation8 + $0x20] sm:$0xf]
    %v138 = vld [vmem:[#allocation8 + $0x24] sm:$0xf]
    %v139 = vld [vmem:[#allocation8 + $0x28] sm:$0xf]
    %v140 = vld [vmem:[#allocation8 + $0x2c] sm:$0xf]
    %v141 = vld [vmem:[#allocation8 + $0x30] sm:$0xf]
    %v142 = vld [vmem:[#allocation8 + $0x34] sm:$0xf]
    %v143 = vld [vmem:[#allocation8 + $0x38] sm:$0xf]
    %v144 = vld [vmem:[#allocation8 + $0x3c] sm:$0xf]
    %v145 = vld [vmem:[%s4] sm:$0x1]
    %v147 = vlaneseq
    %v148 = vshrl.u32 %v147, 7
    %v149 = vsub.s32 0, %v148
    %v150 = vrot.slane %v145, %v149
    %v168 = vunpack.c.l.b16 %v129
    %v169 = vunpack.c.l.b16 %v130
    %v170 = vunpack.c.l.b16 %v131
    %v171 = vunpack.c.l.b16 %v132
    %v172 = vunpack.c.l.b16 %v133
    %v173 = vunpack.c.l.b16 %v134
    %v174 = vunpack.c.l.b16 %v135
    %v175 = vunpack.c.l.b16 %v136
    %v176 = vunpack.c.l.b16 %v137
    %v177 = vunpack.c.l.b16 %v138
    %v178 = vunpack.c.l.b16 %v139
    %v179 = vunpack.c.l.b16 %v140
    %v180 = vunpack.c.l.b16 %v141
    %v181 = vunpack.c.l.b16 %v142
    %v182 = vunpack.c.l.b16 %v143
    %v183 = vunpack.c.l.b16 %v144
    %v184 = vpack.c.b16 %v169, %v168
    %v185 = vpack.c.b16 %v171, %v170
    %v186 = vpack.c.b16 %v173, %v172
    %v187 = vpack.c.b16 %v175, %v174
    %v188 = vpack.c.b16 %v177, %v176
    %v189 = vpack.c.b16 %v179, %v178
    %v190 = vpack.c.b16 %v181, %v180
    %v191 = vpack.c.b16 %v183, %v182
    %200 = vmatprep.subr.bf16.mxu0 0
    %201 = vmatpush1.bf16.msra.mxu0 %v184
    %202 = vmatprep.subr.bf16.mxu0 0
    %203 = vmatpush1.bf16.msra.mxu0 %v185
    %204 = vmatprep.subr.bf16.mxu0 0
    %205 = vmatpush1.bf16.msra.mxu0 %v186
    %206 = vmatprep.subr.bf16.mxu0 0
    %207 = vmatpush1.bf16.msra.mxu0 %v187
    %208 = vmatprep.subr.bf16.mxu0 0
    %209 = vmatpush1.bf16.msra.mxu0 %v188
    %210 = vmatprep.subr.bf16.mxu0 0
    %211 = vmatpush1.bf16.msra.mxu0 %v189
    %212 = vmatprep.subr.bf16.mxu0 0
    %213 = vmatpush1.bf16.msra.mxu0 %v190
    %214 = vmatprep.subr.bf16.mxu0 0
    %215 = vmatpush1.bf16.msra.mxu0 %v191
    %216 = vmatprep.subr.bf16.mxu0 0
    %217 = vmatpush1.bf16.msra.mxu0 0
    %218 = vmatprep.subr.bf16.mxu0 0
    %219 = vmatpush1.bf16.msra.mxu0 0
    %220 = vmatprep.subr.bf16.mxu0 0
    %221 = vmatpush1.bf16.msra.mxu0 0
    %222 = vmatprep.subr.bf16.mxu0 0
    %223 = vmatpush1.bf16.msra.mxu0 0
    %224 = vmatprep.subr.bf16.mxu0 0
    %225 = vmatpush1.bf16.msra.mxu0 0
    %226 = vmatprep.subr.bf16.mxu0 0
    %227 = vmatpush1.bf16.msra.mxu0 0
    %228 = vmatprep.subr.bf16.mxu0 0
    %229 = vmatpush1.bf16.msra.mxu0 0
    %230 = vmatprep.subr.bf16.mxu0 0
    %231 = vmatpush1.bf16.msra.mxu0 0
    %232 = vmatprep.mubr.bf16.mxu0 0
    %233 = vmatmul.mubr.bf16.gmra.mrb[0].mxu0 %v128
    %v234 = vpop.f32.mrb[0].mxu0
    %v235 = vadd.f32 %v150, %v234
    %v236 = vpop.f32.mrb[0].mxu0
    %v237 = vpop.f32.mrb[0].mxu0
    %v238 = vpop.f32.mrb[0].mxu0
    %239 = vdwg.mxu0
    %v240 = vmul.f32 %v235, 0.5
    %v241 = vtanh.pop %v240
    %v242 = vmul.f32 %v241, 0.5
    %v243 = vadd.f32 %v242, 0.5
    %244 = vst [vmem:[#allocation9] sm:$0xff] %v243
    // Predicated region
    $region38: #{tpu_custom_call.1} parent=1 // pred_check
      _
    $region39: #{tpu_custom_call.1} parent=1 // pred_check_branch
      %246 = sbr.rel (0) target = $region41
    $region40: #{tpu_custom_call.1} parent=1 // pred_region
      %s248 = ssub.s32 128, 128
      %249 = vsyncadd [#allocation5], %s248
      %s251 = sshll.u32 [#allocation9], 4
      %s252 = int_to_ptr.vmem [resolvable:$true] %s251
      %254 = dma.vmem_to_hbm [thread:$0]  %s252, 128, %s5, [#allocation5]
    $region41: #{tpu_custom_call.1} parent=1 // pred_fallthru
      _
    // Predicated region
    $region42: #{tpu_custom_call.1} parent=1 // pred_check
      _
    $region43: #{tpu_custom_call.1} parent=1 // pred_check_branch
      %256 = sbr.rel (0) target = $region45
    $region44: #{tpu_custom_call.1} parent=1 // pred_region
      %257 = dma.done [#allocation5], 128
    $region45: #{tpu_custom_call.1} parent=1 // pred_fallthru
      _
    %258 = vsyncpa [#allocation4], 1
    %259 = vsyncpa [#allocation7], 1
    %260 = vsyncpa [#allocation5], 1

// kernel: tpu_custom_call.1
$region0: #{tpu_custom_call.1}
  #allocation0 [shape = 'u32[]', space=smem, size = 0x4, offset = 0x4, fixed_abs, tag = 'smem constant byte address 0x4 - core index']
  #allocation1 [shape = 'u32[144,128]{1,0:T(1,128)}', space=vmem, size = 0x12000, scoped, tag = 'internal scratch']
  #allocation2 [shape = 'bf16[8,128]{1,0:T(8,128)(2,1)}', space=vmem, size = 0x800, scoped, tag = 'scratch operand']
  %s0 = inlined_call_operand.hbm [shape: bf16[8,16], index: 0, kind: input, shape index: {}]
  %s1 = inlined_call_operand.hbm [shape: bf16[16,128], index: 1, kind: input, shape index: {}]
  %s2 = inlined_call_operand.vmem [shape: f32[1,128], index: 2, kind: input, shape index: {}]
  %s3 = inlined_call_operand.hbm [shape: bf16[128,128], index: 3, kind: input, shape index: {}]
  %s4 = inlined_call_operand.vmem [shape: f32[1,128], index: 4, kind: input, shape index: {}]
  %s5 = inlined_call_operand.hbm [shape: f32[8,128], index: 5, kind: output, shape index: {}]
  %s6 = sld [smem:[#allocation0]]
  $region46: #{tpu_custom_call.1} parent=0
    _
  %s8 = ssub.s32 1, %s6
  %s9 = scalar_select 0, %s8, %s6
  $region1: #{tpu_custom_call.1} parent=0
    #allocation3 [shape = 'u8[2048]{0}', space=vmem, size = 0x800, scoped, tag = 'input window, operand 0, single buffered']
    #allocation4 [shape = 's32[1]{0}', space=sflag, size = 0x4, scoped, tag = 'scoped memory for tpu_custom_call.1']
    #allocation5 [shape = 's32[1]{0}', space=sflag, size = 0x4, scoped, tag = 'scoped memory for tpu_custom_call.1']
    #allocation6 [shape = 'u8[4096]{0}', space=vmem, size = 0x1000, scoped, tag = 'input window, operand 1, single buffered']
    #allocation7 [shape = 's32[1]{0}', space=sflag, size = 0x4, scoped, tag = 'scoped memory for tpu_custom_call.1']
    #allocation8 [shape = 'u8[32768]{0}', space=vmem, size = 0x8000, scoped, tag = 'input window, operand 3, single buffered']
    #allocation9 [shape = 'u8[4096]{0}', space=vmem, size = 0x1000, scoped, tag = 'output window, operand 0, single buffered']
    %10 = vsyncpa [#allocation4], 0
    %11 = vsyncpa [#allocation7], 0
    %12 = vsyncpa [#allocation5], 0
    // Predicated region
    $region2: #{tpu_custom_call.1} parent=1 // pred_check
      _
    $region3: #{tpu_custom_call.1} parent=1 // pred_check_branch
      %14 = sbr.rel (0) target = $region5
    $region4: #{tpu_custom_call.1} parent=1 // pred_region
      %s16 = ssub.s32 64, 64
      %17 = vsyncadd [#allocation4], %s16
      %s19 = sshll.u32 [#allocation3], 4
      %s20 = int_to_ptr.vmem [resolvable:$true] %s19
      %22 = dma.hbm_to_vmem [thread:$0]  %s0, 64, %s20, [#allocation4]
    $region5: #{tpu_custom_call.1} parent=1 // pred_fallthru
      _
    // Predicated region
    $region6: #{tpu_custom_call.1} parent=1 // pred_check
      _
    $region7: #{tpu_custom_call.1} parent=1 // pred_check_branch
      %24 = sbr.rel (0) target = $region9
    $region8: #{tpu_custom_call.1} parent=1 // pred_region
      %s26 = ssub.s32 128, 128
      %27 = vsyncadd [#allocation7], %s26
      %s28 = sshll.u32 [#allocation6], 4
      %s29 = int_to_ptr.vmem [resolvable:$true] %s28
      %34 = dma.hbm_to_vmem [thread:$0]  %s1, 128, %s29, [#allocation7], 64, 64, 4
    $region9: #{tpu_custom_call.1} parent=1 // pred_fallthru
      _
    // Predicated region
    $region10: #{tpu_custom_call.1} parent=1 // pred_check
      _
    $region11: #{tpu_custom_call.1} parent=1 // pred_check_branch
      %36 = sbr.rel (0) target = $region13
    $region12: #{tpu_custom_call.1} parent=1 // pred_region
      _
    $region13: #{tpu_custom_call.1} parent=1 // pred_fallthru
      _
    // Predicated region
    $region14: #{tpu_custom_call.1} parent=1 // pred_check
      _
    $region15: #{tpu_custom_call.1} parent=1 // pred_check_branch
      %38 = sbr.rel (0) target = $region17
    $region16: #{tpu_custom_call.1} parent=1 // pred_region
      %s40 = ssub.s32 1024, 1024
      %41 = vsyncadd [#allocation7], %s40
      %s42 = sshll.u32 [#allocation8], 4
      %s43 = int_to_ptr.vmem [resolvable:$true] %s42
      %48 = dma.hbm_to_vmem [thread:$0]  %s3, 1024, %s43, [#allocation7], 64, 64, 4
    $region17: #{tpu_custom_call.1} parent=1 // pred_fallthru
      _
    // Predicated region
    $region18: #{tpu_custom_call.1} parent=1 // pred_check
      _
    $region19: #{tpu_custom_call.1} parent=1 // pred_check_branch
      %50 = sbr.rel (0) target = $region21
    $region20: #{tpu_custom_call.1} parent=1 // pred_region
      _
    $region21: #{tpu_custom_call.1} parent=1 // pred_fallthru
      _
    // Predicated region
    $region22: #{tpu_custom_call.1} parent=1 // pred_check
      _
    $region23: #{tpu_custom_call.1} parent=1 // pred_check_branch
      %52 = sbr.rel (0) target = $region25
    $region24: #{tpu_custom_call.1} parent=1 // pred_region
      %53 = dma.done [#allocation4], 64
    $region25: #{tpu_custom_call.1} parent=1 // pred_fallthru
      _
    // Predicated region
    $region26: #{tpu_custom_call.1} parent=1 // pred_check
      _
    $region27: #{tpu_custom_call.1} parent=1 // pred_check_branch
      %55 = sbr.rel (0) target = $region29
    $region28: #{tpu_custom_call.1} parent=1 // pred_region
      %56 = dma.done [#allocation7], 128
    $region29: #{tpu_custom_call.1} parent=1 // pred_fallthru
      _
    // Predicated region
    $region30: #{tpu_custom_call.1} parent=1 // pred_check
      _
    $region31: #{tpu_custom_call.1} parent=1 // pred_check_branch
      %58 = sbr.rel (0) target = $region33
    $region32: #{tpu_custom_call.1} parent=1 // pred_region
      %59 = dma.done [#allocation7], 1024
    $region33: #{tpu_custom_call.1} parent=1 // pred_fallthru
      _
    %p61 = scmp.eq.s32.totalorder 0, 0
    // Predicated region
    $region34: #{tpu_custom_call.1} parent=1 // pred_check
      %p62 = pneg %p61
    $region35: #{tpu_custom_call.1} parent=1 // pred_check_branch
      %64 = sbr.rel (%p62) target = $region37
    $region36: #{tpu_custom_call.1} parent=1 // pred_region
      %v65 = vld [vmem:[#allocation3] sm:$0xf]
      %v66 = vld [vmem:[#allocation6] sm:$0xf]
      %v67 = vld [vmem:[#allocation6 + $0x4] sm:$0xf]
      %v68 = vld [vmem:[%s2] sm:$0x1]
      %v70 = vlaneseq
      %v71 = vshrl.u32 %v70, 7
      %v72 = vsub.s32 0, %v71
      %v73 = vrot.slane %v68, %v72
      %v77 = vunpack.c.l.b16 %v66
      %v78 = vunpack.c.l.b16 %v67
      %v79 = vpack.c.b16 %v78, %v77
      %vm81 = vcmask 130048
      %v83 = vsel %vm81, %v65, 0
      %85 = vmatprep.subr.bf16.mxu0 0
      %86 = vmatpush1.bf16.msra.mxu0 %v79
      %87 = vmatprep.subr.bf16.mxu0 0
      %88 = vmatpush1.bf16.msra.mxu0 0
      %89 = vmatprep.subr.bf16.mxu0 0
      %90 = vmatpush1.bf16.msra.mxu0 0
      %91 = vmatprep.subr.bf16.mxu0 0
      %92 = vmatpush1.bf16.msra.mxu0 0
      %93 = vmatprep.subr.bf16.mxu0 0
      %94 = vmatpush1.bf16.msra.mxu0 0
      %95 = vmatprep.subr.bf16.mxu0 0
      %96 = vmatpush1.bf16.msra.mxu0 0
      %97 = vmatprep.subr.bf16.mxu0 0
      %98 = vmatpush1.bf16.msra.mxu0 0
      %99 = vmatprep.subr.bf16.mxu0 0
      %100 = vmatpush1.bf16.msra.mxu0 0
      %101 = vmatprep.subr.bf16.mxu0 0
      %102 = vmatpush1.bf16.msra.mxu0 0
      %103 = vmatprep.subr.bf16.mxu0 0
      %104 = vmatpush1.bf16.msra.mxu0 0
      %105 = vmatprep.subr.bf16.mxu0 0
      %106 = vmatpush1.bf16.msra.mxu0 0
      %107 = vmatprep.subr.bf16.mxu0 0
      %108 = vmatpush1.bf16.msra.mxu0 0
      %109 = vmatprep.subr.bf16.mxu0 0
      %110 = vmatpush1.bf16.msra.mxu0 0
      %111 = vmatprep.subr.bf16.mxu0 0
      %112 = vmatpush1.bf16.msra.mxu0 0
      %113 = vmatprep.subr.bf16.mxu0 0
      %114 = vmatpush1.bf16.msra.mxu0 0
      %115 = vmatprep.subr.bf16.mxu0 0
      %116 = vmatpush1.bf16.msra.mxu0 0
      %117 = vmatprep.mubr.bf16.mxu0 0
      %118 = vmatmul.mubr.bf16.gmra.mrb[0].mxu0 %v83
      %v119 = vpop.f32.mrb[0].mxu0
      %v120 = vadd.f32 %v73, %v119
      %v121 = vpop.f32.mrb[0].mxu0
      %v122 = vpop.f32.mrb[0].mxu0
      %v123 = vpop.f32.mrb[0].mxu0
      %124 = vdwg.mxu0
      %v125 = vmax.f32 %v120, 0.0
      %v126 = vpack.c.bf16 %v125, %v125
      %127 = vst [vmem:[#allocation2] sm:$0xf] %v126
    $region37: #{tpu_custom_call.1} parent=1 // pred_fallthru
      _
    %v128 = vld [vmem:[#allocation2] sm:$0xf]
    %v129 = vld [vmem:[#allocation8] sm:$0xf]
    %v130 = vld [vmem:[#allocation8 + $0x4] sm:$0xf]
    %v131 = vld [vmem:[#allocation8 + $0x8] sm:$0xf]
    %v132 = vld [vmem:[#allocation8 + $0xc] sm:$0xf]
    %v133 = vld [vmem:[#allocation8 + $0x10] sm:$0xf]
    %v134 = vld [vmem:[#allocation8 + $0x14] sm:$0xf]
    %v135 = vld [vmem:[#allocation8 + $0x18] sm:$0xf]
    %v136 = vld [vmem:[#allocation8 + $0x1c] sm:$0xf]
    %v137 = vld [vmem:[#allocation8 + $0x20] sm:$0xf]
    %v138 = vld [vmem:[#allocation8 + $0x24] sm:$0xf]
    %v139 = vld [vmem:[#allocation8 + $0x28] sm:$0xf]
    %v140 = vld [vmem:[#allocation8 + $0x2c] sm:$0xf]
    %v141 = vld [vmem:[#allocation8 + $0x30] sm:$0xf]
    %v142 = vld [vmem:[#allocation8 + $0x34] sm:$0xf]
    %v143 = vld [vmem:[#allocation8 + $0x38] sm:$0xf]
    %v144 = vld [vmem:[#allocation8 + $0x3c] sm:$0xf]
    %v145 = vld [vmem:[%s4] sm:$0x1]
    %v147 = vlaneseq
    %v148 = vshrl.u32 %v147, 7
    %v149 = vsub.s32 0, %v148
    %v150 = vrot.slane %v145, %v149
    %v168 = vunpack.c.l.b16 %v129
    %v169 = vunpack.c.l.b16 %v130
    %v170 = vunpack.c.l.b16 %v131
    %v171 = vunpack.c.l.b16 %v132
    %v172 = vunpack.c.l.b16 %v133
    %v173 = vunpack.c.l.b16 %v134
    %v174 = vunpack.c.l.b16 %v135
    %v175 = vunpack.c.l.b16 %v136
    %v176 = vunpack.c.l.b16 %v137
    %v177 = vunpack.c.l.b16 %v138
    %v178 = vunpack.c.l.b16 %v139
    %v179 = vunpack.c.l.b16 %v140
    %v180 = vunpack.c.l.b16 %v141
    %v181 = vunpack.c.l.b16 %v142
    %v182 = vunpack.c.l.b16 %v143
    %v183 = vunpack.c.l.b16 %v144
    %v184 = vpack.c.b16 %v169, %v168
    %v185 = vpack.c.b16 %v171, %v170
    %v186 = vpack.c.b16 %v173, %v172
    %v187 = vpack.c.b16 %v175, %v174
    %v188 = vpack.c.b16 %v177, %v176
    %v189 = vpack.c.b16 %v179, %v178
    %v190 = vpack.c.b16 %v181, %v180
    %v191 = vpack.c.b16 %v183, %v182
    %200 = vmatprep.subr.bf16.mxu0 0
    %201 = vmatpush1.bf16.msra.mxu0 %v184
    %202 = vmatprep.subr.bf16.mxu0 0
    %203 = vmatpush1.bf16.msra.mxu0 %v185
    %204 = vmatprep.subr.bf16.mxu0 0
    %205 = vmatpush1.bf16.msra.mxu0 %v186
    %206 = vmatprep.subr.bf16.mxu0 0
    %207 = vmatpush1.bf16.msra.mxu0 %v187
    %208 = vmatprep.subr.bf16.mxu0 0
    %209 = vmatpush1.bf16.msra.mxu0 %v188
    %210 = vmatprep.subr.bf16.mxu0 0
    %211 = vmatpush1.bf16.msra.mxu0 %v189
    %212 = vmatprep.subr.bf16.mxu0 0
    %213 = vmatpush1.bf16.msra.mxu0 %v190
    %214 = vmatprep.subr.bf16.mxu0 0
    %215 = vmatpush1.bf16.msra.mxu0 %v191
    %216 = vmatprep.subr.bf16.mxu0 0
    %217 = vmatpush1.bf16.msra.mxu0 0
    %218 = vmatprep.subr.bf16.mxu0 0
    %219 = vmatpush1.bf16.msra.mxu0 0
    %220 = vmatprep.subr.bf16.mxu0 0
    %221 = vmatpush1.bf16.msra.mxu0 0
    %222 = vmatprep.subr.bf16.mxu0 0
    %223 = vmatpush1.bf16.msra.mxu0 0
    %224 = vmatprep.subr.bf16.mxu0 0
    %225 = vmatpush1.bf16.msra.mxu0 0
    %226 = vmatprep.subr.bf16.mxu0 0
    %227 = vmatpush1.bf16.msra.mxu0 0
    %228 = vmatprep.subr.bf16.mxu0 0
    %229 = vmatpush1.bf16.msra.mxu0 0
    %230 = vmatprep.subr.bf16.mxu0 0
    %231 = vmatpush1.bf16.msra.mxu0 0
    %232 = vmatprep.mubr.bf16.mxu0 0
    %233 = vmatmul.mubr.bf16.gmra.mrb[0].mxu0 %v128
    %v234 = vpop.f32.mrb[0].mxu0
    %v235 = vadd.f32 %v150, %v234
    %v236 = vpop.f32.mrb[0].mxu0
    %v237 = vpop.f32.mrb[0].mxu0
    %v238 = vpop.f32.mrb[0].mxu0
    %239 = vdwg.mxu0
    %v240 = vmul.f32 %v235, 0.5
    %v241 = vtanh.pop %v240
    %v242 = vmul.f32 %v241, 0.5
    %v243 = vadd.f32 %v242, 0.5
    %244 = vst [vmem:[#allocation9] sm:$0xff] %v243
    // Predicated region
    $region38: #{tpu_custom_call.1} parent=1 // pred_check
      _
    $region39: #{tpu_custom_call.1} parent=1 // pred_check_branch
      %246 = sbr.rel (0) target = $region41
    $region40: #{tpu_custom_call.1} parent=1 // pred_region
      %s248 = ssub.s32 128, 128
      %249 = vsyncadd [#allocation5], %s248
      %s251 = sshll.u32 [#allocation9], 4
      %s252 = int_to_ptr.vmem [resolvable:$true] %s251
      %254 = dma.vmem_to_hbm [thread:$0]  %s252, 128, %s5, [#allocation5]
    $region41: #{tpu_custom_call.1} parent=1 // pred_fallthru
      _
    // Predicated region
    $region42: #{tpu_custom_call.1} parent=1 // pred_check
      _
    $region43: #{tpu_custom_call.1} parent=1 // pred_check_branch
      %256 = sbr.rel (0) target = $region45
    $region44: #{tpu_custom_call.1} parent=1 // pred_region
      %257 = dma.done [#allocation5], 128
    $region45: #{tpu_custom_call.1} parent=1 // pred_fallthru
      _
    %258 = vsyncpa [#allocation4], 1
    %259 = vsyncpa [#allocation7], 1
    %260 = vsyncpa [#allocation5], 1

</llo_original>
